<compile_context>
chip_gen: v5e
topology: v5e:2x2
jax: 0.10.0
libtpu: 0.0.40
codegen_flags: <defaults>
</compile_context>

<pallas_src>
import math
from functools import partial

import jax
import jax.numpy as jnp
from jax.experimental import pallas as pl
from jax.experimental.pallas import tpu as pltpu


def _cdiv(a, b):
    return -(-a // b)


def _vmem_capacity_bytes(default=64 * 1024 * 1024):
    """Physical VMEM per TensorCore; falls back to the smallest (v7x) value."""
    try:
        info = pltpu.get_tpu_info()
        cap = getattr(info, "vmem_capacity_bytes", None)
        if cap:
            return int(cap)
    except Exception:
        pass
    return default


def _choose_row_tile(M, D, k, depth, in_itemsize, out_itemsize, budget_bytes):
    """Pick a row tile so double-buffered I/O blocks + in-kernel f32 temps fit."""
    io_row_bytes = D * (k * in_itemsize + depth * out_itemsize)
    # k hoisted f32 casts + f32 accumulator + cast-for-store temporary.
    temp_row_bytes = D * 4 * (k + 2)
    bytes_per_row = 2 * io_row_bytes + temp_row_bytes
    tm = budget_bytes // max(bytes_per_row, 1)

    # Keep the grid at >= 4 (even) steps where possible so the single "parallel"
    # axis can be split across v7x's two TensorCores — but never shrink a step
    # below ~1 MiB of HBM traffic (the ~0.35us per-step overhead would show).
    min_rows = max(8, (1 << 20) // max(io_row_bytes, 1))
    for steps in (4, 2):
        cap = _cdiv(M, steps)
        if cap >= min_rows:
            tm = min(tm, cap)
            break

    tm = int(min(M, max(tm, 8)))
    if tm >= M:
        return M

    tm = max(8, (tm // 8) * 8)  # sublane (8) rule when not taking the full axis
    # Snap to a nearby multiple of 8 that minimizes padded rows in the ragged
    # final grid step (padding is still DMA'd and computed, then discarded).
    best_t, best_pad = tm, _cdiv(M, tm) * tm - M
    t = tm
    for _ in range(256):
        t -= 8
        if t < 8 or t < tm // 2:
            break
        pad = _cdiv(M, t) * t - M
        if pad < best_pad:
            best_t, best_pad = t, pad
            if pad == 0:
                break
    return best_t


def _wfm_kernel(w_ref, *refs, k, depth):
    """One grid step = one row-tile of the flattened (M, D) feature maps.

    w_ref  : SMEM (depth, k) float32 — Linear weight.
    refs   : k input refs, each VMEM (TM, D), then one output ref VMEM (depth, TM, D).
    """
    x_refs = refs[:k]
    o_ref = refs[k]

    # Hoist the k input-tile loads (and f32 casts) out of the depth loop so each
    # input block is read from VMEM once, not depth times.
    xs = [x_refs[i][...].astype(jnp.float32) for i in range(k)]

    # depth * k is tiny and static -> fully unrolled scalar-weighted sums.
    for j in range(depth):
        acc = xs[0] * w_ref[j, 0]
        for i in range(1, k):
            acc = acc + xs[i] * w_ref[j, i]
        o_ref[j] = acc.astype(o_ref.dtype)  # lane-dense (TM, D) store


def weighted_feature_maps(feature_maps, weight, *, depth_major=False, out_dtype=None):
    """JAX/Pallas equivalent of WeightedFeatureMaps.forward.

    depth_major=False returns the torch layout (..., D, depth).
    depth_major=True  returns (depth, ..., D) with NO extra transpose pass.
    """
    assert isinstance(feature_maps, (list, tuple)), "Input should be a list of feature maps"
    k = len(feature_maps)
    depth = int(weight.shape[0])
    assert weight.shape == (depth, k), "Number of feature maps and weights should match"

    x0 = feature_maps[0]
    orig_shape = tuple(x0.shape)                # (..., D), typically (B, N, D)
    D = int(orig_shape[-1])
    M = int(math.prod(orig_shape[:-1]))
    for fm in feature_maps:
        assert fm.shape == orig_shape, "All feature maps must share a shape"

    # Compute in f32, store in the input dtype by default (no silent bf16->f32
    # promotion of output writes / transposes).
    if out_dtype is None:
        out_dtype = x0.dtype
    out_dtype = jnp.dtype(out_dtype)
    in_itemsize = jnp.dtype(x0.dtype).itemsize
    out_itemsize = out_dtype.itemsize

    flats = [jnp.reshape(fm, (M, D)) for fm in feature_maps]  # free reshape
    weight_f32 = weight.astype(jnp.float32)

    vmem_cap = _vmem_capacity_bytes()
    budget = (3 * vmem_cap) // 8          # ~48 MiB on v5e/v6e, ~24 MiB on v7x
    vmem_limit = (3 * vmem_cap) // 4      # ~96 MiB on v5e/v6e, ~48 MiB on v7x
    tm = _choose_row_tile(M, D, k, depth, in_itemsize, out_itemsize, budget)
    grid = (_cdiv(M, tm),)

    cost = pl.CostEstimate(
        flops=2 * k * depth * M * D,
        transcendentals=0,
        bytes_accessed=(k * in_itemsize + depth * out_itemsize) * M * D,
    )

    out_flat = pl.pallas_call(
        partial(_wfm_kernel, k=k, depth=depth),
        out_shape=jax.ShapeDtypeStruct((depth, M, D), out_dtype),
        grid=grid,
        in_specs=[pl.BlockSpec(memory_space=pltpu.MemorySpace.SMEM)]       # weight
        + [pl.BlockSpec((tm, D), lambda m: (m, 0)) for _ in range(k)],      # feature maps
        out_specs=pl.BlockSpec((depth, tm, D), lambda m: (0, m, 0)),
        compiler_params=pltpu.CompilerParams(
            dimension_semantics=("parallel",),   # row tiles are independent
            vmem_limit_bytes=int(vmem_limit),
        ),
        cost_estimate=cost,
    )(weight_f32, *flats)

    if depth_major:
        # Transpose-free fast path for consumers that index per decoder layer.
        return jnp.reshape(out_flat, (depth,) + orig_shape)

    # torch layout (..., D, depth): this moveaxis is a full extra HBM pass over
    # the output (read + depth-strided write); prefer depth_major=True when the
    # consumer allows it.
    # TODO(synk): fold this interleave into the kernel (XLU lane interleave to a
    # lane-dense (M, D*depth) output) once the minor-dim (D, depth) relayout is
    # verified to lower cleanly on v5e/v6e/v7x.
    out = jnp.moveaxis(out_flat, 0, -1)
    return jnp.reshape(out, orig_shape + (depth,))


class WeightedFeatureMaps:
    """JAX port of avion's WeightedFeatureMaps (Linear(k -> decoder_depth, bias=False))."""

    def __init__(self, k, embed_dim, *, norm_layer=None, decoder_depth, key=None):
        del embed_dim, norm_layer  # unused by the reference forward as well
        self.k = k
        self.decoder_depth = decoder_depth
        if key is None:
            key = jax.random.PRNGKey(0)
        std_dev = 1.0 / math.sqrt(k)
        # weight shape matches nn.Linear(k, decoder_depth): (decoder_depth, k)
        self.weight = (std_dev * jax.random.normal(
            key, (decoder_depth, k))).astype(jnp.float32)

    def __call__(self, feature_maps, *, depth_major=False):
        assert isinstance(feature_maps, (list, tuple)), "Input should be a list of feature maps"
        assert len(feature_maps) == self.weight.shape[1], \
            "Number of feature maps and weights should match"
        return weighted_feature_maps(list(feature_maps), self.weight,
                                     depth_major=depth_major)


if __name__ == "__main__":
    key = jax.random.PRNGKey(0)
    B, N, D = 2, 16, 128          # batch, tokens, embed dim (lane-friendly D)
    k, decoder_depth = 4, 3       # number of feature maps, decoder layers

    w_key, *fm_keys = jax.random.split(key, k + 1)
    feature_maps = [jax.random.normal(fk, (B, N, D), dtype=jnp.float32)
                    for fk in fm_keys]

    module = WeightedFeatureMaps(k, D, decoder_depth=decoder_depth, key=w_key)

    # Torch-layout output (matches the reference module exactly).
    out = jax.block_until_ready(module(feature_maps))
    assert out.shape == (B, N, D, decoder_depth), f"bad output shape {out.shape}"

    # Reference: torch.stack(feature_maps, dim=-1) followed by the bias-free Linear.
    stacked = jnp.stack(feature_maps, axis=-1)                  # (B, N, D, k)
    ref = jnp.einsum("bndk,jk->bndj", stacked, module.weight)   # (B, N, D, depth)
    assert bool(jnp.allclose(out, ref, rtol=1e-5, atol=1e-5)), \
        "Pallas WeightedFeatureMaps does not match reference"

    # Transpose-free depth-major fast path (perf feedback item 1).
    out_dm = jax.block_until_ready(
        weighted_feature_maps(feature_maps, module.weight, depth_major=True))
    assert out_dm.shape == (decoder_depth, B, N, D), f"bad depth-major shape {out_dm.shape}"
    assert bool(jnp.allclose(jnp.moveaxis(out_dm, 0, -1), ref, rtol=1e-5, atol=1e-5)), \
        "depth-major Pallas output does not match reference"

    print("KERNEL_OK")
</pallas_src>

<mosaic_0001>
module attributes {stable_mosaic.version = 11 : i64} {
  func.func @_wfm_kernel(%arg0: i32, %arg1: memref<3x4xf32, #tpu.memory_space<smem>>, %arg2: memref<32x128xf32, #tpu.memory_space<vmem>>, %arg3: memref<32x128xf32, #tpu.memory_space<vmem>>, %arg4: memref<32x128xf32, #tpu.memory_space<vmem>>, %arg5: memref<32x128xf32, #tpu.memory_space<vmem>>, %arg6: memref<3x32x128xf32, #tpu.memory_space<vmem>>) attributes {dimension_semantics = [#tpu.dimension_semantics<parallel>], iteration_bounds = array<i64: 1>, scalar_prefetch = 0 : i64, scratch_operands = 0 : i64, tpu.core_type = #tpu.core_type<tc>, window_params = [{transform_indices = @transform_0, window_bounds = array<i64: 3, 4>}, {transform_indices = @transform_1, window_bounds = array<i64: 32, 128>}, {transform_indices = @transform_2, window_bounds = array<i64: 32, 128>}, {transform_indices = @transform_3, window_bounds = array<i64: 32, 128>}, {transform_indices = @transform_4, window_bounds = array<i64: 32, 128>}, {transform_indices = @transform_5, window_bounds = array<i64: 3, 32, 128>}]} {
    %c0 = arith.constant 0 : index
    %c0_0 = arith.constant 0 : index
    %0 = vector.load %arg2[%c0, %c0_0] : memref<32x128xf32, #tpu.memory_space<vmem>>, vector<32x128xf32>
    %c0_1 = arith.constant 0 : index
    %c0_2 = arith.constant 0 : index
    %1 = vector.load %arg3[%c0_1, %c0_2] : memref<32x128xf32, #tpu.memory_space<vmem>>, vector<32x128xf32>
    %c0_3 = arith.constant 0 : index
    %c0_4 = arith.constant 0 : index
    %2 = vector.load %arg4[%c0_3, %c0_4] : memref<32x128xf32, #tpu.memory_space<vmem>>, vector<32x128xf32>
    %c0_5 = arith.constant 0 : index
    %c0_6 = arith.constant 0 : index
    %3 = vector.load %arg5[%c0_5, %c0_6] : memref<32x128xf32, #tpu.memory_space<vmem>>, vector<32x128xf32>
    %c0_7 = arith.constant 0 : index
    %c0_8 = arith.constant 0 : index
    %4 = memref.load %arg1[%c0_7, %c0_8] : memref<3x4xf32, #tpu.memory_space<smem>>
    %5 = vector.broadcast %4 : f32 to vector<32x128xf32>
    %6 = arith.mulf %0, %5 : vector<32x128xf32>
    %c0_9 = arith.constant 0 : index
    %c1 = arith.constant 1 : index
    %7 = memref.load %arg1[%c0_9, %c1] : memref<3x4xf32, #tpu.memory_space<smem>>
    %8 = vector.broadcast %7 : f32 to vector<32x128xf32>
    %9 = arith.mulf %1, %8 : vector<32x128xf32>
    %10 = arith.addf %6, %9 : vector<32x128xf32>
    %c0_10 = arith.constant 0 : index
    %c2 = arith.constant 2 : index
    %11 = memref.load %arg1[%c0_10, %c2] : memref<3x4xf32, #tpu.memory_space<smem>>
    %12 = vector.broadcast %11 : f32 to vector<32x128xf32>
    %13 = arith.mulf %2, %12 : vector<32x128xf32>
    %14 = arith.addf %10, %13 : vector<32x128xf32>
    %c0_11 = arith.constant 0 : index
    %c3 = arith.constant 3 : index
    %15 = memref.load %arg1[%c0_11, %c3] : memref<3x4xf32, #tpu.memory_space<smem>>
    %16 = vector.broadcast %15 : f32 to vector<32x128xf32>
    %17 = arith.mulf %3, %16 : vector<32x128xf32>
    %18 = arith.addf %14, %17 : vector<32x128xf32>
    %c0_12 = arith.constant 0 : index
    %c0_13 = arith.constant 0 : index
    %c0_14 = arith.constant 0 : index
    %19 = vector.load %arg6[%c0_12, %c0_13, %c0_14] : memref<3x32x128xf32, #tpu.memory_space<vmem>>, vector<1x32x128xf32>
    %20 = vector.shape_cast %19 : vector<1x32x128xf32> to vector<32x128xf32>
    %21 = vector.shape_cast %18 : vector<32x128xf32> to vector<1x32x128xf32>
    tpu.vector_store %arg6[%c0_12, %c0_13, %c0_14], %21 {strides = array<i32>} : memref<3x32x128xf32, #tpu.memory_space<vmem>>, vector<1x32x128xf32>,
    %c1_15 = arith.constant 1 : index
    %c0_16 = arith.constant 0 : index
    %22 = memref.load %arg1[%c1_15, %c0_16] : memref<3x4xf32, #tpu.memory_space<smem>>
    %23 = vector.broadcast %22 : f32 to vector<32x128xf32>
    %24 = arith.mulf %0, %23 : vector<32x128xf32>
    %c1_17 = arith.constant 1 : index
    %c1_18 = arith.constant 1 : index
    %25 = memref.load %arg1[%c1_17, %c1_18] : memref<3x4xf32, #tpu.memory_space<smem>>
    %26 = vector.broadcast %25 : f32 to vector<32x128xf32>
    %27 = arith.mulf %1, %26 : vector<32x128xf32>
    %28 = arith.addf %24, %27 : vector<32x128xf32>
    %c1_19 = arith.constant 1 : index
    %c2_20 = arith.constant 2 : index
    %29 = memref.load %arg1[%c1_19, %c2_20] : memref<3x4xf32, #tpu.memory_space<smem>>
    %30 = vector.broadcast %29 : f32 to vector<32x128xf32>
    %31 = arith.mulf %2, %30 : vector<32x128xf32>
    %32 = arith.addf %28, %31 : vector<32x128xf32>
    %c1_21 = arith.constant 1 : index
    %c3_22 = arith.constant 3 : index
    %33 = memref.load %arg1[%c1_21, %c3_22] : memref<3x4xf32, #tpu.memory_space<smem>>
    %34 = vector.broadcast %33 : f32 to vector<32x128xf32>
    %35 = arith.mulf %3, %34 : vector<32x128xf32>
    %36 = arith.addf %32, %35 : vector<32x128xf32>
    %c1_23 = arith.constant 1 : index
    %c0_24 = arith.constant 0 : index
    %c0_25 = arith.constant 0 : index
    %37 = vector.load %arg6[%c1_23, %c0_24, %c0_25] : memref<3x32x128xf32, #tpu.memory_space<vmem>>, vector<1x32x128xf32>
    %38 = vector.shape_cast %37 : vector<1x32x128xf32> to vector<32x128xf32>
    %39 = vector.shape_cast %36 : vector<32x128xf32> to vector<1x32x128xf32>
    tpu.vector_store %arg6[%c1_23, %c0_24, %c0_25], %39 {strides = array<i32>} : memref<3x32x128xf32, #tpu.memory_space<vmem>>, vector<1x32x128xf32>,
    %c2_26 = arith.constant 2 : index
    %c0_27 = arith.constant 0 : index
    %40 = memref.load %arg1[%c2_26, %c0_27] : memref<3x4xf32, #tpu.memory_space<smem>>
    %41 = vector.broadcast %40 : f32 to vector<32x128xf32>
    %42 = arith.mulf %0, %41 : vector<32x128xf32>
    %c2_28 = arith.constant 2 : index
    %c1_29 = arith.constant 1 : index
    %43 = memref.load %arg1[%c2_28, %c1_29] : memref<3x4xf32, #tpu.memory_space<smem>>
    %44 = vector.broadcast %43 : f32 to vector<32x128xf32>
    %45 = arith.mulf %1, %44 : vector<32x128xf32>
    %46 = arith.addf %42, %45 : vector<32x128xf32>
    %c2_30 = arith.constant 2 : index
    %c2_31 = arith.constant 2 : index
    %47 = memref.load %arg1[%c2_30, %c2_31] : memref<3x4xf32, #tpu.memory_space<smem>>
    %48 = vector.broadcast %47 : f32 to vector<32x128xf32>
    %49 = arith.mulf %2, %48 : vector<32x128xf32>
    %50 = arith.addf %46, %49 : vector<32x128xf32>
    %c2_32 = arith.constant 2 : index
    %c3_33 = arith.constant 3 : index
    %51 = memref.load %arg1[%c2_32, %c3_33] : memref<3x4xf32, #tpu.memory_space<smem>>
    %52 = vector.broadcast %51 : f32 to vector<32x128xf32>
    %53 = arith.mulf %3, %52 : vector<32x128xf32>
    %54 = arith.addf %50, %53 : vector<32x128xf32>
    %c2_34 = arith.constant 2 : index
    %c0_35 = arith.constant 0 : index
    %c0_36 = arith.constant 0 : index
    %55 = vector.load %arg6[%c2_34, %c0_35, %c0_36] : memref<3x32x128xf32, #tpu.memory_space<vmem>>, vector<1x32x128xf32>
    %56 = vector.shape_cast %55 : vector<1x32x128xf32> to vector<32x128xf32>
    %57 = vector.shape_cast %54 : vector<32x128xf32> to vector<1x32x128xf32>
    tpu.vector_store %arg6[%c2_34, %c0_35, %c0_36], %57 {strides = array<i32>} : memref<3x32x128xf32, #tpu.memory_space<vmem>>, vector<1x32x128xf32>,
    return
  }
  func.func @transform_0(%arg0: i32) -> (i32, i32) {
    %c0_i32 = arith.constant 0 : i32
    %c0_i32_0 = arith.constant 0 : i32
    %c0_i32_1 = arith.constant 0 : i32
    return %c0_i32, %c0_i32_0 : i32, i32
  }
  func.func @transform_1(%arg0: i32) -> (i32, i32) {
    %c0_i32 = arith.constant 0 : i32
    %c0_i32_0 = arith.constant 0 : i32
    return %arg0, %c0_i32 : i32, i32
  }
  func.func @transform_2(%arg0: i32) -> (i32, i32) {
    %c0_i32 = arith.constant 0 : i32
    %c0_i32_0 = arith.constant 0 : i32
    return %arg0, %c0_i32 : i32, i32
  }
  func.func @transform_3(%arg0: i32) -> (i32, i32) {
    %c0_i32 = arith.constant 0 : i32
    %c0_i32_0 = arith.constant 0 : i32
    return %arg0, %c0_i32 : i32, i32
  }
  func.func @transform_4(%arg0: i32) -> (i32, i32) {
    %c0_i32 = arith.constant 0 : i32
    %c0_i32_0 = arith.constant 0 : i32
    return %arg0, %c0_i32 : i32, i32
  }
  func.func @transform_5(%arg0: i32) -> (i32, i32, i32) {
    %c0_i32 = arith.constant 0 : i32
    %c0_i32_0 = arith.constant 0 : i32
    %c0_i32_1 = arith.constant 0 : i32
    return %c0_i32, %arg0, %c0_i32_0 : i32, i32, i32
  }
}

</mosaic_0001>

<llo_original>
// kernel: tpu_custom_call.1
$region0: #{tpu_custom_call.1}
  #allocation0 [shape = 'u32[]', space=smem, size = 0x4, offset = 0x4, fixed_abs, tag = 'smem constant byte address 0x4 - core index']
  #allocation1 [shape = 'u32[72,128]{1,0:T(1,128)}', space=vmem, size = 0x9000, scoped, tag = 'internal scratch']
  %s0 = inlined_call_operand.hbm [shape: f32[3,4], index: 0, kind: input, shape index: {}]
  %s1 = inlined_call_operand.hbm [shape: f32[32,128], index: 1, kind: input, shape index: {}]
  %s2 = inlined_call_operand.hbm [shape: f32[32,128], index: 2, kind: input, shape index: {}]
  %s3 = inlined_call_operand.hbm [shape: f32[32,128], index: 3, kind: input, shape index: {}]
  %s4 = inlined_call_operand.hbm [shape: f32[32,128], index: 4, kind: input, shape index: {}]
  %s5 = inlined_call_operand.hbm [shape: f32[3,32,128], index: 5, kind: output, shape index: {}]
  %s6 = sld [smem:[#allocation0]]
  $region50: #{tpu_custom_call.1} parent=0
    _
  %s8 = ssub.s32 1, %s6
  %s9 = scalar_select 0, %s8, %s6
  $region1: #{tpu_custom_call.1} parent=0
    #allocation2 [shape = 'u8[2048]{0}', space=smem, size = 0x800, scoped, tag = 'input window, operand 0, single buffered']
    #allocation3 [shape = 's32[1]{0}', space=sflag, size = 0x4, scoped, tag = 'scoped memory for tpu_custom_call.1']
    #allocation4 [shape = 's32[1]{0}', space=sflag, size = 0x4, scoped, tag = 'scoped memory for tpu_custom_call.1']
    #allocation5 [shape = 's32[1]{0}', space=sflag, size = 0x4, scoped, tag = 'scoped memory for tpu_custom_call.1']
    #allocation6 [shape = 'u8[16384]{0}', space=vmem, size = 0x4000, scoped, tag = 'input window, operand 1, single buffered']
    #allocation7 [shape = 'u8[16384]{0}', space=vmem, size = 0x4000, scoped, tag = 'input window, operand 2, single buffered']
    #allocation8 [shape = 's32[1]{0}', space=sflag, size = 0x4, scoped, tag = 'scoped memory for tpu_custom_call.1']
    #allocation9 [shape = 'u8[16384]{0}', space=vmem, size = 0x4000, scoped, tag = 'input window, operand 3, single buffered']
    #allocation10 [shape = 'u8[16384]{0}', space=vmem, size = 0x4000, scoped, tag = 'input window, operand 4, single buffered']
    #allocation11 [shape = 's32[1]{0}', space=sflag, size = 0x4, scoped, tag = 'scoped memory for tpu_custom_call.1']
    #allocation12 [shape = 'u8[49152]{0}', space=vmem, size = 0xc000, scoped, tag = 'output window, operand 0, single buffered']
    %10 = vsyncpa [#allocation5], 0
    %11 = vsyncpa [#allocation3], 0
    %12 = vsyncpa [#allocation8], 0
    %13 = vsyncpa [#allocation11], 0
    %14 = vsyncpa [#allocation4], 0
    // Predicated region
    $region2: #{tpu_custom_call.1} parent=1 // pred_check
      _
    $region3: #{tpu_custom_call.1} parent=1 // pred_check_branch
      %16 = sbr.rel (0) target = $region5
    $region4: #{tpu_custom_call.1} parent=1 // pred_region
      %18 = vsyncadd [#allocation5], 0
      %s20 = sshll.u32 %s0, 4
      %s21 = int_to_ptr.hbm [resolvable:$true] %s20
      %23 = dma.hbm_to_smem %s21, 64, [#allocation2], [#allocation5]
    $region5: #{tpu_custom_call.1} parent=1 // pred_fallthru
      _
    // Predicated region
    $region6: #{tpu_custom_call.1} parent=1 // pred_check
      _
    $region7: #{tpu_custom_call.1} parent=1 // pred_check_branch
      %25 = sbr.rel (0) target = $region9
    $region8: #{tpu_custom_call.1} parent=1 // pred_region
      %27 = vsyncadd [#allocation3], 0
      %s28 = sshll.u32 %s1, 4
      %s29 = int_to_ptr.hbm [resolvable:$true] %s28
      %s30 = sshll.u32 [#allocation6], 4
      %s31 = int_to_ptr.vmem [resolvable:$true] %s30
      %36 = dma.hbm_to_vmem [thread:$0]  %s29, 512, %s31, [#allocation3], 128, 128, 8
    $region9: #{tpu_custom_call.1} parent=1 // pred_fallthru
      _
    // Predicated region
    $region10: #{tpu_custom_call.1} parent=1 // pred_check
      _
    $region11: #{tpu_custom_call.1} parent=1 // pred_check_branch
      %38 = sbr.rel (0) target = $region13
    $region12: #{tpu_custom_call.1} parent=1 // pred_region
      %40 = vsyncadd [#allocation8], 0
      %s41 = sshll.u32 %s2, 4
      %s42 = int_to_ptr.hbm [resolvable:$true] %s41
      %s43 = sshll.u32 [#allocation7], 4
      %s44 = int_to_ptr.vmem [resolvable:$true] %s43
      %49 = dma.hbm_to_vmem [thread:$0]  %s42, 512, %s44, [#allocation8], 128, 128, 8
    $region13: #{tpu_custom_call.1} parent=1 // pred_fallthru
      _
    // Predicated region
    $region14: #{tpu_custom_call.1} parent=1 // pred_check
      _
    $region15: #{tpu_custom_call.1} parent=1 // pred_check_branch
      %51 = sbr.rel (0) target = $region17
    $region16: #{tpu_custom_call.1} parent=1 // pred_region
      %53 = vsyncadd [#allocation8], 0
      %s54 = sshll.u32 %s3, 4
      %s55 = int_to_ptr.hbm [resolvable:$true] %s54
      %s56 = sshll.u32 [#allocation9], 4
      %s57 = int_to_ptr.vmem [resolvable:$true] %s56
      %62 = dma.hbm_to_vmem [thread:$0]  %s55, 512, %s57, [#allocation8], 128, 128, 8
    $region17: #{tpu_custom_call.1} parent=1 // pred_fallthru
      _
    // Predicated region
    $region18: #{tpu_custom_call.1} parent=1 // pred_check
      _
    $region19: #{tpu_custom_call.1} parent=1 // pred_check_branch
      %64 = sbr.rel (0) target = $region21
    $region20: #{tpu_custom_call.1} parent=1 // pred_region
      %66 = vsyncadd [#allocation11], 0
      %s67 = sshll.u32 %s4, 4
      %s68 = int_to_ptr.hbm [resolvable:$true] %s67
      %s69 = sshll.u32 [#allocation10], 4
      %s70 = int_to_ptr.vmem [resolvable:$true] %s69
      %75 = dma.hbm_to_vmem [thread:$0]  %s68, 512, %s70, [#allocation11], 128, 128, 8
    $region21: #{tpu_custom_call.1} parent=1 // pred_fallthru
      _
    // Predicated region
    $region22: #{tpu_custom_call.1} parent=1 // pred_check
      _
    $region23: #{tpu_custom_call.1} parent=1 // pred_check_branch
      %77 = sbr.rel (0) target = $region25
    $region24: #{tpu_custom_call.1} parent=1 // pred_region
      %79 = dma.done [#allocation5], 64
    $region25: #{tpu_custom_call.1} parent=1 // pred_fallthru
      _
    // Predicated region
    $region26: #{tpu_custom_call.1} parent=1 // pred_check
      _
    $region27: #{tpu_custom_call.1} parent=1 // pred_check_branch
      %81 = sbr.rel (0) target = $region29
    $region28: #{tpu_custom_call.1} parent=1 // pred_region
      %83 = dma.done [#allocation3], 512
    $region29: #{tpu_custom_call.1} parent=1 // pred_fallthru
      _
    // Predicated region
    $region30: #{tpu_custom_call.1} parent=1 // pred_check
      _
    $region31: #{tpu_custom_call.1} parent=1 // pred_check_branch
      %85 = sbr.rel (0) target = $region33
    $region32: #{tpu_custom_call.1} parent=1 // pred_region
      %87 = dma.done [#allocation8], 512
    $region33: #{tpu_custom_call.1} parent=1 // pred_fallthru
      _
    // Predicated region
    $region34: #{tpu_custom_call.1} parent=1 // pred_check
      _
    $region35: #{tpu_custom_call.1} parent=1 // pred_check_branch
      %89 = sbr.rel (0) target = $region37
    $region36: #{tpu_custom_call.1} parent=1 // pred_region
      %91 = dma.done [#allocation8], 512
    $region37: #{tpu_custom_call.1} parent=1 // pred_fallthru
      _
    // Predicated region
    $region38: #{tpu_custom_call.1} parent=1 // pred_check
      _
    $region39: #{tpu_custom_call.1} parent=1 // pred_check_branch
      %93 = sbr.rel (0) target = $region41
    $region40: #{tpu_custom_call.1} parent=1 // pred_region
      %95 = dma.done [#allocation11], 512
    $region41: #{tpu_custom_call.1} parent=1 // pred_fallthru
      _
    %96 = sfence
    %v97 = vld [vmem:[#allocation6] sm:$0xff]
    %v98 = vld [vmem:[#allocation6 + $0x8] sm:$0xff]
    %v99 = vld [vmem:[#allocation6 + $0x10] sm:$0xff]
    %v100 = vld [vmem:[#allocation6 + $0x18] sm:$0xff]
    %v101 = vld [vmem:[#allocation7] sm:$0xff]
    %v102 = vld [vmem:[#allocation7 + $0x8] sm:$0xff]
    %v103 = vld [vmem:[#allocation7 + $0x10] sm:$0xff]
    %v104 = vld [vmem:[#allocation7 + $0x18] sm:$0xff]
    %v105 = vld [vmem:[#allocation9] sm:$0xff]
    %v106 = vld [vmem:[#allocation9 + $0x8] sm:$0xff]
    %v107 = vld [vmem:[#allocation9 + $0x10] sm:$0xff]
    %v108 = vld [vmem:[#allocation9 + $0x18] sm:$0xff]
    %v109 = vld [vmem:[#allocation10] sm:$0xff]
    %v110 = vld [vmem:[#allocation10 + $0x8] sm:$0xff]
    %v111 = vld [vmem:[#allocation10 + $0x10] sm:$0xff]
    %v112 = vld [vmem:[#allocation10 + $0x18] sm:$0xff]
    %s113 = sld [smem:[#allocation2]]
    %v114 = vstv %s113
    %v115 = vmul.f32 %v97, %v114
    %v116 = vmul.f32 %v98, %v114
    %v117 = vmul.f32 %v99, %v114
    %v118 = vmul.f32 %v100, %v114
    %s119 = sld [smem:[#allocation2 + $0x1]]
    %v120 = vstv %s119
    %v121 = vmul.f32 %v101, %v120
    %v122 = vmul.f32 %v102, %v120
    %v123 = vmul.f32 %v103, %v120
    %v124 = vmul.f32 %v104, %v120
    %v125 = vadd.f32 %v115, %v121
    %v126 = vadd.f32 %v116, %v122
    %v127 = vadd.f32 %v117, %v123
    %v128 = vadd.f32 %v118, %v124
    %s129 = sld [smem:[#allocation2 + $0x2]]
    %v130 = vstv %s129
    %v131 = vmul.f32 %v105, %v130
    %v132 = vmul.f32 %v106, %v130
    %v133 = vmul.f32 %v107, %v130
    %v134 = vmul.f32 %v108, %v130
    %v135 = vadd.f32 %v125, %v131
    %v136 = vadd.f32 %v126, %v132
    %v137 = vadd.f32 %v127, %v133
    %v138 = vadd.f32 %v128, %v134
    %s139 = sld [smem:[#allocation2 + $0x3]]
    %v140 = vstv %s139
    %v141 = vmul.f32 %v109, %v140
    %v142 = vmul.f32 %v110, %v140
    %v143 = vmul.f32 %v111, %v140
    %v144 = vmul.f32 %v112, %v140
    %v145 = vadd.f32 %v135, %v141
    %v146 = vadd.f32 %v136, %v142
    %v147 = vadd.f32 %v137, %v143
    %v148 = vadd.f32 %v138, %v144
    %149 = vst [vmem:[#allocation12] sm:$0xff] %v145
    %150 = vst [vmem:[#allocation12 + $0x8] sm:$0xff] %v146
    %151 = vst [vmem:[#allocation12 + $0x10] sm:$0xff] %v147
    %152 = vst [vmem:[#allocation12 + $0x18] sm:$0xff] %v148
    %s153 = sld [smem:[#allocation2 + $0x80]]
    %v154 = vstv %s153
    %v155 = vmul.f32 %v97, %v154
    %v156 = vmul.f32 %v98, %v154
    %v157 = vmul.f32 %v99, %v154
    %v158 = vmul.f32 %v100, %v154
    %s159 = sld [smem:[#allocation2 + $0x81]]
    %v160 = vstv %s159
    %v161 = vmul.f32 %v101, %v160
    %v162 = vmul.f32 %v102, %v160
    %v163 = vmul.f32 %v103, %v160
    %v164 = vmul.f32 %v104, %v160
    %v165 = vadd.f32 %v155, %v161
    %v166 = vadd.f32 %v156, %v162
    %v167 = vadd.f32 %v157, %v163
    %v168 = vadd.f32 %v158, %v164
    %s169 = sld [smem:[#allocation2 + $0x82]]
    %v170 = vstv %s169
    %v171 = vmul.f32 %v105, %v170
    %v172 = vmul.f32 %v106, %v170
    %v173 = vmul.f32 %v107, %v170
    %v174 = vmul.f32 %v108, %v170
    %v175 = vadd.f32 %v165, %v171
    %v176 = vadd.f32 %v166, %v172
    %v177 = vadd.f32 %v167, %v173
    %v178 = vadd.f32 %v168, %v174
    %s179 = sld [smem:[#allocation2 + $0x83]]
    %v180 = vstv %s179
    %v181 = vmul.f32 %v109, %v180
    %v182 = vmul.f32 %v110, %v180
    %v183 = vmul.f32 %v111, %v180
    %v184 = vmul.f32 %v112, %v180
    %v185 = vadd.f32 %v175, %v181
    %v186 = vadd.f32 %v176, %v182
    %v187 = vadd.f32 %v177, %v183
    %v188 = vadd.f32 %v178, %v184
    %s189 = scalar_lea.vmem [#allocation12], 32
    %190 = vst [vmem:[%s189] sm:$0xff] %v185
    %191 = vst [vmem:[%s189 + $0x8] sm:$0xff] %v186
    %192 = vst [vmem:[%s189 + $0x10] sm:$0xff] %v187
    %193 = vst [vmem:[%s189 + $0x18] sm:$0xff] %v188
    %s194 = sld [smem:[#allocation2 + $0x100]]
    %v195 = vstv %s194
    %v196 = vmul.f32 %v97, %v195
    %v197 = vmul.f32 %v98, %v195
    %v198 = vmul.f32 %v99, %v195
    %v199 = vmul.f32 %v100, %v195
    %s200 = sld [smem:[#allocation2 + $0x101]]
    %v201 = vstv %s200
    %v202 = vmul.f32 %v101, %v201
    %v203 = vmul.f32 %v102, %v201
    %v204 = vmul.f32 %v103, %v201
    %v205 = vmul.f32 %v104, %v201
    %v206 = vadd.f32 %v196, %v202
    %v207 = vadd.f32 %v197, %v203
    %v208 = vadd.f32 %v198, %v204
    %v209 = vadd.f32 %v199, %v205
    %s210 = sld [smem:[#allocation2 + $0x102]]
    %v211 = vstv %s210
    %v212 = vmul.f32 %v105, %v211
    %v213 = vmul.f32 %v106, %v211
    %v214 = vmul.f32 %v107, %v211
    %v215 = vmul.f32 %v108, %v211
    %v216 = vadd.f32 %v206, %v212
    %v217 = vadd.f32 %v207, %v213
    %v218 = vadd.f32 %v208, %v214
    %v219 = vadd.f32 %v209, %v215
    %s220 = sld [smem:[#allocation2 + $0x103]]
    %v221 = vstv %s220
    %v222 = vmul.f32 %v109, %v221
    %v223 = vmul.f32 %v110, %v221
    %v224 = vmul.f32 %v111, %v221
    %v225 = vmul.f32 %v112, %v221
    %v226 = vadd.f32 %v216, %v222
    %v227 = vadd.f32 %v217, %v223
    %v228 = vadd.f32 %v218, %v224
    %v229 = vadd.f32 %v219, %v225
    %s230 = scalar_lea.vmem [#allocation12], 64
    %231 = vst [vmem:[%s230] sm:$0xff] %v226
    %232 = vst [vmem:[%s230 + $0x8] sm:$0xff] %v227
    %233 = vst [vmem:[%s230 + $0x10] sm:$0xff] %v228
    %234 = vst [vmem:[%s230 + $0x18] sm:$0xff] %v229
    // Predicated region
    $region42: #{tpu_custom_call.1} parent=1 // pred_check
      _
    $region43: #{tpu_custom_call.1} parent=1 // pred_check_branch
      %236 = sbr.rel (0) target = $region45
    $region44: #{tpu_custom_call.1} parent=1 // pred_region
      %238 = vsyncadd [#allocation4], 0
      %s239 = sshll.u32 [#allocation12], 4
      %s240 = int_to_ptr.vmem [resolvable:$true] %s239
      %s241 = sshll.u32 %s5, 4
      %s242 = int_to_ptr.hbm [resolvable:$true] %s241
      %247 = dma.vmem_to_hbm [thread:$0]  %s240, 1536, %s242, [#allocation4], 128, 128, 8
    $region45: #{tpu_custom_call.1} parent=1 // pred_fallthru
      _
    // Predicated region
    $region46: #{tpu_custom_call.1} parent=1 // pred_check
      _
    $region47: #{tpu_custom_call.1} parent=1 // pred_check_branch
      %249 = sbr.rel (0) target = $region49
    $region48: #{tpu_custom_call.1} parent=1 // pred_region
      %251 = dma.done [#allocation4], 1536
    $region49: #{tpu_custom_call.1} parent=1 // pred_fallthru
      _
    %252 = vsyncpa [#allocation3], 1
    %253 = vsyncpa [#allocation8], 1
    %254 = vsyncpa [#allocation11], 1
    %255 = vsyncpa [#allocation4], 1
    %256 = vsyncpa [#allocation5], 1

</llo_original>
